<compile_context>
chip_gen: v7x
topology: tpu7x:2x2x1
jax: 0.10.0
libtpu: 0.0.40
codegen_flags: <defaults>
</compile_context>

<pallas_src>
import jax
import jax.numpy as jnp
from jax.experimental import pallas as pl
from jax.experimental.pallas import tpu as pltpu


# ----------------------------------------------------------------------------
# Kernel
# ----------------------------------------------------------------------------
def dueling_dqn_kernel(x_ref, w1_ref, b1_ref, w2_ref, b2_ref, wq_ref, bq_ref,
                       out_ref):
    # Matmul-input dtype follows the stored weight dtype (bf16 or f32);
    # accumulation and all elementwise math stay in f32.
    cdt = w1_ref.dtype

    x = x_ref[...].astype(cdt)                                          # [TB, D_in]

    # Backbone: Linear -> ReLU -> Linear -> ReLU   (f32 accumulate, f32 ReLU)
    h1 = jnp.dot(x, w1_ref[...], preferred_element_type=jnp.float32) + b1_ref[...]
    h1 = jnp.maximum(h1, 0.0)                                           # [TB, H] f32
    h2 = jnp.dot(h1.astype(cdt), w2_ref[...],
                 preferred_element_type=jnp.float32) + b2_ref[...]
    h2 = jnp.maximum(h2, 0.0)                                           # [TB, F] f32

    # Folded dueling head: q = h2 @ W_q + b_q
    #   (== val + (adv - adv.mean(dim=1, keepdim=True)) of the original module)
    q = jnp.dot(h2.astype(cdt), wq_ref[...],
                preferred_element_type=jnp.float32) + bq_ref[...]       # [TB, A] f32
    out_ref[...] = q.astype(out_ref.dtype)


# ----------------------------------------------------------------------------
# Wrapper
# ----------------------------------------------------------------------------
_TB_CAP = 512   # cap the batch tile so x/out double buffers stay small for huge B
_TB_MIN = 128   # aim for >=128 rows per tile so the MXU M dimension is well used


def _pick_batch_tile(B):
    """Largest divisor of B that is a multiple of 8 and <= cap; prefer >=2 grid steps."""
    if B % 8 != 0:
        return B                       # full-extent block is always legal
    tb = 8
    d = 8
    while d <= min(B, _TB_CAP):
        if B % d == 0:
            tb = d
        d += 8
    # Prefer at least 2 grid steps so the "parallel" axis can be sharded
    # across both TensorCores on v7x.
    if tb == B and B >= 2 * _TB_MIN and (B // 2) % 8 == 0:
        tb = B // 2
    return tb


def fold_dueling_heads(wv, bv, wa, ba):
    """Fold val + (adv - adv.mean()) into a single [F, A] head (exact algebra, f32)."""
    wq = wv + wa - wa.mean(axis=1, keepdims=True)    # [F, A]
    bq = bv + ba - ba.mean(axis=1, keepdims=True)    # [1, A]
    return wq, bq


def prepare_params(params, weight_dtype=jnp.bfloat16):
    """Fold the dueling heads and cast weights (not biases) to the storage dtype."""
    wq, bq = fold_dueling_heads(params["wv"], params["bv"],
                                params["wa"], params["ba"])
    return {
        "w1": params["w1"].astype(weight_dtype),
        "b1": params["b1"].astype(jnp.float32),
        "w2": params["w2"].astype(weight_dtype),
        "b2": params["b2"].astype(jnp.float32),
        "wq": wq.astype(weight_dtype),
        "bq": bq.astype(jnp.float32),
    }


def dueling_dqn_forward(x, prepped, *, batch_tile=None):
    """x: [B, D_in] float32.  prepped: output of prepare_params()."""
    B, D_in = x.shape
    H = prepped["w1"].shape[1]
    F = prepped["w2"].shape[1]
    A = prepped["wq"].shape[1]

    tb = batch_tile if batch_tile is not None else _pick_batch_tile(B)
    assert B % tb == 0, "batch must be divisible by the batch tile"
    assert tb % 8 == 0 or tb == B, "batch tile must be a multiple of 8 (or the full batch)"
    grid = (B // tb,)

    def fixed(shape):
        # Grid-invariant (resident) block: the index map returns the same block
        # every step so the pipeline never re-fetches it; the weight set is a
        # few KB, so double-buffer bookkeeping is negligible.
        return pl.BlockSpec(shape, lambda i: tuple(0 for _ in shape))

    return pl.pallas_call(
        dueling_dqn_kernel,
        out_shape=jax.ShapeDtypeStruct((B, A), jnp.float32),
        grid_spec=pltpu.PrefetchScalarGridSpec(
            num_scalar_prefetch=0,
            grid=grid,
            in_specs=[
                pl.BlockSpec((tb, D_in), lambda i: (i, 0)),   # x, tiled over batch
                fixed((D_in, H)), fixed((1, H)),              # w1, b1
                fixed((H, F)),    fixed((1, F)),              # w2, b2
                fixed((F, A)),    fixed((1, A)),              # folded W_q, b_q
            ],
            out_specs=pl.BlockSpec((tb, A), lambda i: (i, 0)),
        ),
        compiler_params=pltpu.CompilerParams(
            dimension_semantics=("parallel",)),
    )(x, prepped["w1"], prepped["b1"], prepped["w2"], prepped["b2"],
      prepped["wq"], prepped["bq"])


# ----------------------------------------------------------------------------
# Deterministic synthetic parameters (stored as [in, out]) and JAX references
# ----------------------------------------------------------------------------
def make_params(key, d_in, hidden, fc_out_dim, output_dim):
    ks = jax.random.split(key, 8)

    def lin(kw, kb, fan_in, fan_out):
        bound = 1.0 / jnp.sqrt(fan_in)
        w = jax.random.uniform(kw, (fan_in, fan_out), jnp.float32, -bound, bound)
        b = jax.random.uniform(kb, (1, fan_out), jnp.float32, -bound, bound)
        return w, b

    w1, b1 = lin(ks[0], ks[1], d_in, hidden)
    w2, b2 = lin(ks[2], ks[3], hidden, fc_out_dim)
    wv, bv = lin(ks[4], ks[5], fc_out_dim, 1)
    wa, ba = lin(ks[6], ks[7], fc_out_dim, output_dim)
    return dict(w1=w1, b1=b1, w2=w2, b2=b2, wv=wv, bv=bv, wa=wa, ba=ba)


def reference_forward_module(x, p):
    """Original (unfused) dueling formula in f32 — mirrors the PyTorch module."""
    h1 = jnp.maximum(x @ p["w1"] + p["b1"], 0.0)
    h2 = jnp.maximum(h1 @ p["w2"] + p["b2"], 0.0)
    val = h2 @ p["wv"] + p["bv"]
    adv = h2 @ p["wa"] + p["ba"]
    return val + (adv - adv.mean(axis=1, keepdims=True))


def reference_forward_prepped(x, prepped):
    """Same folded/quantized math as the kernel, in plain JAX."""
    cdt = prepped["w1"].dtype
    h1 = jnp.maximum(
        jnp.dot(x.astype(cdt), prepped["w1"],
                preferred_element_type=jnp.float32) + prepped["b1"], 0.0)
    h2 = jnp.maximum(
        jnp.dot(h1.astype(cdt), prepped["w2"],
                preferred_element_type=jnp.float32) + prepped["b2"], 0.0)
    return jnp.dot(h2.astype(cdt), prepped["wq"],
                   preferred_element_type=jnp.float32) + prepped["bq"]


# TODO(synk): optimizer / loss / save / load / actions() (host-side argmax over
# replay observations) are training/host machinery, not part of the forward kernel.

if __name__ == "__main__":
    key = jax.random.PRNGKey(0)
    k_x, k_p, k_x2 = jax.random.split(key, 3)

    D_in, H, F, A = 16, 64, 32, 4          # input_dim, hidden, fc_out_dim, output_dim
    params = make_params(k_p, D_in, H, F, A)

    # --- Tiled batch: tb=128 -> grid (2,), both v7x TensorCores get work ----
    B = 256
    x = jax.random.normal(k_x, (B, D_in), jnp.float32)

    # f32 weights: folded-head kernel must match the original dueling formula.
    p_f32 = prepare_params(params, weight_dtype=jnp.float32)
    q = jax.block_until_ready(dueling_dqn_forward(x, p_f32))
    q_ref = reference_forward_module(x, params)
    assert q.shape == (B, A)
    assert jnp.allclose(q, q_ref, atol=1e-4, rtol=1e-4), "f32 mismatch vs module reference"

    # bf16 weight storage (f32 accumulate / f32 elementwise): match quantized JAX ref.
    p_bf16 = prepare_params(params, weight_dtype=jnp.bfloat16)
    qb = jax.block_until_ready(dueling_dqn_forward(x, p_bf16))
    qb_ref = reference_forward_prepped(x, p_bf16)
    assert jnp.allclose(qb, qb_ref, atol=2e-3, rtol=2e-3), "bf16 mismatch vs quantized reference"

    # --- Tiny batch (tb == B fallback path) ---------------------------------
    x_small = jax.random.normal(k_x2, (8, D_in), jnp.float32)
    q_small = jax.block_until_ready(dueling_dqn_forward(x_small, p_f32))
    q_small_ref = reference_forward_module(x_small, params)
    assert jnp.allclose(q_small, q_small_ref, atol=1e-4, rtol=1e-4), "small-batch mismatch"

    print("KERNEL_OK")
</pallas_src>

<mosaic_0001>
module attributes {stable_mosaic.version = 11 : i64} {
  func.func @dueling_dqn_kernel(%arg0: i32, %arg1: memref<128x16xf32, #tpu.memory_space<vmem>>, %arg2: memref<16x64xf32, #tpu.memory_space<vmem>>, %arg3: memref<1x64xf32, #tpu.memory_space<vmem>>, %arg4: memref<64x32xf32, #tpu.memory_space<vmem>>, %arg5: memref<1x32xf32, #tpu.memory_space<vmem>>, %arg6: memref<32x4xf32, #tpu.memory_space<vmem>>, %arg7: memref<1x4xf32, #tpu.memory_space<vmem>>, %arg8: memref<128x4xf32, #tpu.memory_space<vmem>>) attributes {dimension_semantics = [#tpu.dimension_semantics<parallel>], iteration_bounds = array<i64: 2>, scalar_prefetch = 0 : i64, scratch_operands = 0 : i64, tpu.core_type = #tpu.core_type<tc>, window_params = [{transform_indices = @transform_0, window_bounds = array<i64: 128, 16>}, {pipeline_mode = #tpu.pipeline_mode<synchronous>, transform_indices = @transform_1, window_bounds = array<i64: 16, 64>}, {pipeline_mode = #tpu.pipeline_mode<synchronous>, transform_indices = @transform_2, window_bounds = array<i64: 1, 64>}, {pipeline_mode = #tpu.pipeline_mode<synchronous>, transform_indices = @transform_3, window_bounds = array<i64: 64, 32>}, {pipeline_mode = #tpu.pipeline_mode<synchronous>, transform_indices = @transform_4, window_bounds = array<i64: 1, 32>}, {pipeline_mode = #tpu.pipeline_mode<synchronous>, transform_indices = @transform_5, window_bounds = array<i64: 32, 4>}, {pipeline_mode = #tpu.pipeline_mode<synchronous>, transform_indices = @transform_6, window_bounds = array<i64: 1, 4>}, {transform_indices = @transform_7, window_bounds = array<i64: 128, 4>}]} {
    %c0 = arith.constant 0 : index
    %c0_0 = arith.constant 0 : index
    %0 = vector.load %arg1[%c0, %c0_0] : memref<128x16xf32, #tpu.memory_space<vmem>>, vector<128x16xf32>
    %c0_1 = arith.constant 0 : index
    %c0_2 = arith.constant 0 : index
    %1 = vector.load %arg2[%c0_1, %c0_2] : memref<16x64xf32, #tpu.memory_space<vmem>>, vector<16x64xf32>
    %cst = arith.constant dense<0.000000e+00> : vector<128x64xf32>
    %2 = tpu.matmul %0, %1, %cst {dimension_numbers = #tpu.dot_dimension_numbers<[1], [0], [0], [1], [0, 0, 1, 1], [], []>} : vector<128x16xf32>, vector<16x64xf32>, vector<128x64xf32> -> vector<128x64xf32>
    %c0_3 = arith.constant 0 : index
    %c0_4 = arith.constant 0 : index
    %3 = vector.load %arg3[%c0_3, %c0_4] : memref<1x64xf32, #tpu.memory_space<vmem>>, vector<1x64xf32>
    %4 = vector.broadcast %3 : vector<1x64xf32> to vector<128x64xf32>
    %5 = arith.addf %2, %4 : vector<128x64xf32>
    %cst_5 = arith.constant 0.000000e+00 : f32
    %6 = vector.broadcast %cst_5 : f32 to vector<128x64xf32>
    %7 = arith.maximumf %5, %6 : vector<128x64xf32>
    %c0_6 = arith.constant 0 : index
    %c0_7 = arith.constant 0 : index
    %8 = vector.load %arg4[%c0_6, %c0_7] : memref<64x32xf32, #tpu.memory_space<vmem>>, vector<64x32xf32>
    %cst_8 = arith.constant dense<0.000000e+00> : vector<128x32xf32>
    %9 = tpu.matmul %7, %8, %cst_8 {dimension_numbers = #tpu.dot_dimension_numbers<[1], [0], [0], [1], [0, 0, 1, 1], [], []>} : vector<128x64xf32>, vector<64x32xf32>, vector<128x32xf32> -> vector<128x32xf32>
    %c0_9 = arith.constant 0 : index
    %c0_10 = arith.constant 0 : index
    %10 = vector.load %arg5[%c0_9, %c0_10] : memref<1x32xf32, #tpu.memory_space<vmem>>, vector<1x32xf32>
    %11 = vector.broadcast %10 : vector<1x32xf32> to vector<128x32xf32>
    %12 = arith.addf %9, %11 : vector<128x32xf32>
    %cst_11 = arith.constant 0.000000e+00 : f32
    %13 = vector.broadcast %cst_11 : f32 to vector<128x32xf32>
    %14 = arith.maximumf %12, %13 : vector<128x32xf32>
    %c0_12 = arith.constant 0 : index
    %c0_13 = arith.constant 0 : index
    %15 = vector.load %arg6[%c0_12, %c0_13] : memref<32x4xf32, #tpu.memory_space<vmem>>, vector<32x4xf32>
    %cst_14 = arith.constant dense<0.000000e+00> : vector<128x4xf32>
    %16 = tpu.matmul %14, %15, %cst_14 {dimension_numbers = #tpu.dot_dimension_numbers<[1], [0], [0], [1], [0, 0, 1, 1], [], []>} : vector<128x32xf32>, vector<32x4xf32>, vector<128x4xf32> -> vector<128x4xf32>
    %c0_15 = arith.constant 0 : index
    %c0_16 = arith.constant 0 : index
    %17 = vector.load %arg7[%c0_15, %c0_16] : memref<1x4xf32, #tpu.memory_space<vmem>>, vector<1x4xf32>
    %18 = vector.broadcast %17 : vector<1x4xf32> to vector<128x4xf32>
    %19 = arith.addf %16, %18 : vector<128x4xf32>
    %c0_17 = arith.constant 0 : index
    %c0_18 = arith.constant 0 : index
    %20 = vector.load %arg8[%c0_17, %c0_18] : memref<128x4xf32, #tpu.memory_space<vmem>>, vector<128x4xf32>
    tpu.vector_store %arg8[%c0_17, %c0_18], %19 {strides = array<i32>} : memref<128x4xf32, #tpu.memory_space<vmem>>, vector<128x4xf32>,
    return
  }
  func.func @transform_0(%arg0: i32) -> (i32, i32) {
    %c0_i32 = arith.constant 0 : i32
    %c0_i32_0 = arith.constant 0 : i32
    return %arg0, %c0_i32 : i32, i32
  }
  func.func @transform_1(%arg0: i32) -> (i32, i32) {
    %c0_i32 = arith.constant 0 : i32
    %c0_i32_0 = arith.constant 0 : i32
    %c0_i32_1 = arith.constant 0 : i32
    return %c0_i32, %c0_i32_0 : i32, i32
  }
  func.func @transform_2(%arg0: i32) -> (i32, i32) {
    %c0_i32 = arith.constant 0 : i32
    %c0_i32_0 = arith.constant 0 : i32
    %c0_i32_1 = arith.constant 0 : i32
    return %c0_i32, %c0_i32_0 : i32, i32
  }
  func.func @transform_3(%arg0: i32) -> (i32, i32) {
    %c0_i32 = arith.constant 0 : i32
    %c0_i32_0 = arith.constant 0 : i32
    %c0_i32_1 = arith.constant 0 : i32
    return %c0_i32, %c0_i32_0 : i32, i32
  }
  func.func @transform_4(%arg0: i32) -> (i32, i32) {
    %c0_i32 = arith.constant 0 : i32
    %c0_i32_0 = arith.constant 0 : i32
    %c0_i32_1 = arith.constant 0 : i32
    return %c0_i32, %c0_i32_0 : i32, i32
  }
  func.func @transform_5(%arg0: i32) -> (i32, i32) {
    %c0_i32 = arith.constant 0 : i32
    %c0_i32_0 = arith.constant 0 : i32
    %c0_i32_1 = arith.constant 0 : i32
    return %c0_i32, %c0_i32_0 : i32, i32
  }
  func.func @transform_6(%arg0: i32) -> (i32, i32) {
    %c0_i32 = arith.constant 0 : i32
    %c0_i32_0 = arith.constant 0 : i32
    %c0_i32_1 = arith.constant 0 : i32
    return %c0_i32, %c0_i32_0 : i32, i32
  }
  func.func @transform_7(%arg0: i32) -> (i32, i32) {
    %c0_i32 = arith.constant 0 : i32
    %c0_i32_0 = arith.constant 0 : i32
    return %arg0, %c0_i32 : i32, i32
  }
}

</mosaic_0001>

<llo_original>
// kernel: tpu_custom_call.1
$region0: #{tpu_custom_call.1}
  #allocation0 [shape = 'u32[]', space=smem, size = 0x4, offset = 0x4, fixed_abs, tag = 'smem constant byte address 0x4 - core index']
  #allocation1 [shape = 'u32[144,128]{1,0:T(1,128)}', space=vmem, size = 0x12000, scoped, tag = 'internal scratch']
  %s0 = inlined_call_operand.vmem [shape: f32[256,16], index: 0, kind: input, shape index: {}]
  %s1 = inlined_call_operand.vmem [shape: f32[16,64], index: 1, kind: input, shape index: {}]
  %s2 = inlined_call_operand.vmem [shape: f32[1,64], index: 2, kind: input, shape index: {}]
  %s3 = inlined_call_operand.vmem [shape: f32[64,32], index: 3, kind: input, shape index: {}]
  %s4 = inlined_call_operand.vmem [shape: f32[1,32], index: 4, kind: input, shape index: {}]
  %s5 = inlined_call_operand.vmem [shape: f32[32,4], index: 5, kind: input, shape index: {}]
  %s6 = inlined_call_operand.vmem [shape: f32[1,4], index: 6, kind: input, shape index: {}]
  %s7 = inlined_call_operand.vmem [shape: f32[256,4], index: 7, kind: output, shape index: {}]
  %s8 = sld [smem:[#allocation0]]
  $region61: #{tpu_custom_call.1} parent=0
    _
  %s10 = ssub.s32 1, %s8
  %s11 = scalar_select 0, %s10, %s8
  loop: start=0, step=1, limit=4
  $region2: #{tpu_custom_call.1} parent=0 // loop_pre_header
    _
  $region3: #{tpu_custom_call.1} parent=0 // loop_header
    %s13 = sphi 0, %s17
    %p14 = scmp.ge.s32.totalorder %s13, 4
    %s23 = sphi 0, %s25
    %s26 = sphi 0, %s23
    %s27 = sphi 0, %s26
    %s43 = sphi 0, %s27
    %s47 = sphi 0, %s47
    %s49 = sphi 0, %s47
    %s50 = sphi 0, %s49
    %s64 = sphi 0, %s50
    %s68 = sphi 0, %s68
    %s70 = sphi 0, %s68
    %s71 = sphi 0, %s70
    %s85 = sphi 0, %s71
    %s89 = sphi 0, %s89
    %s91 = sphi 0, %s89
    %s92 = sphi 0, %s91
    %s106 = sphi 0, %s92
    %s110 = sphi 0, %s110
    %s112 = sphi 0, %s110
    %s113 = sphi 0, %s112
    %s127 = sphi 0, %s113
    %s131 = sphi 0, %s131
    %s133 = sphi 0, %s131
    %s134 = sphi 0, %s133
    %s148 = sphi 0, %s134
    %s152 = sphi 0, %s152
    %s154 = sphi 0, %s152
    %s155 = sphi 0, %s154
    %s169 = sphi 0, %s155
    %s175 = sphi 0, %s177
    %s178 = sphi 0, %s175
    %s179 = sphi 0, %s178
    %s195 = sphi 0, %s179
  $region4: #{tpu_custom_call.1} parent=0 // loop_header_branch
    %16 = sbr.rel (%p14) target = $region8
  $region5: #{tpu_custom_call.1} parent=0 // loop_body
    %s18 = ssub.s32 %s13, 1
    %s19 = ssub.s32 %s13, 2
    %s20 = sadd.s32 %s13, 1
    %s21 = ssub.s32 %s13, %s20
    %p22 = scmp.eq.s32.totalorder %s21, 0
    %s24 = sadd.s32 %s23, 1
    %s25 = scalar_select %p22, %s23, %s24
    %p28 = pneg %p22
    %p29 = scmp.eq.s32.totalorder %s13, 1
    %p30 = por %p28, %p29
    %p31 = scmp.ne.s32.totalorder %s23, %s26
    %p32 = scmp.eq.s32.totalorder %s13, 0
    %p33 = por %p31, %p32
    %p34 = scmp.ne.s32.totalorder %s23, %s26
    %p35 = scmp.eq.s32.totalorder %s18, 1
    %p36 = por %p34, %p35
    %p37 = scmp.ne.s32.totalorder %s26, %s27
    %p38 = scmp.eq.s32.totalorder %s18, 0
    %p39 = por %p37, %p38
    %p40 = scmp.ne.s32.totalorder %s26, %s27
    %p41 = scmp.eq.s32.totalorder %s19, 1
    %p42 = por %p40, %p41
    %p44 = scmp.ne.s32.totalorder %s27, %s43
    %p45 = scmp.eq.s32.totalorder %s19, 0
    %p46 = por %p44, %p45
    %s48 = sadd.s32 %s47, 1
    %p51 = scmp.eq.s32.totalorder %s13, 1
    %p52 = scmp.ne.s32.totalorder %s47, %s49
    %p53 = scmp.eq.s32.totalorder %s13, 0
    %p54 = por %p52, %p53
    %p55 = scmp.ne.s32.totalorder %s47, %s49
    %p56 = scmp.eq.s32.totalorder %s18, 1
    %p57 = por %p55, %p56
    %p58 = scmp.ne.s32.totalorder %s49, %s50
    %p59 = scmp.eq.s32.totalorder %s18, 0
    %p60 = por %p58, %p59
    %p61 = scmp.ne.s32.totalorder %s49, %s50
    %p62 = scmp.eq.s32.totalorder %s19, 1
    %p63 = por %p61, %p62
    %p65 = scmp.ne.s32.totalorder %s50, %s64
    %p66 = scmp.eq.s32.totalorder %s19, 0
    %p67 = por %p65, %p66
    %s69 = sadd.s32 %s68, 1
    %p72 = scmp.eq.s32.totalorder %s13, 1
    %p73 = scmp.ne.s32.totalorder %s68, %s70
    %p74 = scmp.eq.s32.totalorder %s13, 0
    %p75 = por %p73, %p74
    %p76 = scmp.ne.s32.totalorder %s68, %s70
    %p77 = scmp.eq.s32.totalorder %s18, 1
    %p78 = por %p76, %p77
    %p79 = scmp.ne.s32.totalorder %s70, %s71
    %p80 = scmp.eq.s32.totalorder %s18, 0
    %p81 = por %p79, %p80
    %p82 = scmp.ne.s32.totalorder %s70, %s71
    %p83 = scmp.eq.s32.totalorder %s19, 1
    %p84 = por %p82, %p83
    %p86 = scmp.ne.s32.totalorder %s71, %s85
    %p87 = scmp.eq.s32.totalorder %s19, 0
    %p88 = por %p86, %p87
    %s90 = sadd.s32 %s89, 1
    %p93 = scmp.eq.s32.totalorder %s13, 1
    %p94 = scmp.ne.s32.totalorder %s89, %s91
    %p95 = scmp.eq.s32.totalorder %s13, 0
    %p96 = por %p94, %p95
    %p97 = scmp.ne.s32.totalorder %s89, %s91
    %p98 = scmp.eq.s32.totalorder %s18, 1
    %p99 = por %p97, %p98
    %p100 = scmp.ne.s32.totalorder %s91, %s92
    %p101 = scmp.eq.s32.totalorder %s18, 0
    %p102 = por %p100, %p101
    %p103 = scmp.ne.s32.totalorder %s91, %s92
    %p104 = scmp.eq.s32.totalorder %s19, 1
    %p105 = por %p103, %p104
    %p107 = scmp.ne.s32.totalorder %s92, %s106
    %p108 = scmp.eq.s32.totalorder %s19, 0
    %p109 = por %p107, %p108
    %s111 = sadd.s32 %s110, 1
    %p114 = scmp.eq.s32.totalorder %s13, 1
    %p115 = scmp.ne.s32.totalorder %s110, %s112
    %p116 = scmp.eq.s32.totalorder %s13, 0
    %p117 = por %p115, %p116
    %p118 = scmp.ne.s32.totalorder %s110, %s112
    %p119 = scmp.eq.s32.totalorder %s18, 1
    %p120 = por %p118, %p119
    %p121 = scmp.ne.s32.totalorder %s112, %s113
    %p122 = scmp.eq.s32.totalorder %s18, 0
    %p123 = por %p121, %p122
    %p124 = scmp.ne.s32.totalorder %s112, %s113
    %p125 = scmp.eq.s32.totalorder %s19, 1
    %p126 = por %p124, %p125
    %p128 = scmp.ne.s32.totalorder %s113, %s127
    %p129 = scmp.eq.s32.totalorder %s19, 0
    %p130 = por %p128, %p129
    %s132 = sadd.s32 %s131, 1
    %p135 = scmp.eq.s32.totalorder %s13, 1
    %p136 = scmp.ne.s32.totalorder %s131, %s133
    %p137 = scmp.eq.s32.totalorder %s13, 0
    %p138 = por %p136, %p137
    %p139 = scmp.ne.s32.totalorder %s131, %s133
    %p140 = scmp.eq.s32.totalorder %s18, 1
    %p141 = por %p139, %p140
    %p142 = scmp.ne.s32.totalorder %s133, %s134
    %p143 = scmp.eq.s32.totalorder %s18, 0
    %p144 = por %p142, %p143
    %p145 = scmp.ne.s32.totalorder %s133, %s134
    %p146 = scmp.eq.s32.totalorder %s19, 1
    %p147 = por %p145, %p146
    %p149 = scmp.ne.s32.totalorder %s134, %s148
    %p150 = scmp.eq.s32.totalorder %s19, 0
    %p151 = por %p149, %p150
    %s153 = sadd.s32 %s152, 1
    %p156 = scmp.eq.s32.totalorder %s13, 1
    %p157 = scmp.ne.s32.totalorder %s152, %s154
    %p158 = scmp.eq.s32.totalorder %s13, 0
    %p159 = por %p157, %p158
    %p160 = scmp.ne.s32.totalorder %s152, %s154
    %p161 = scmp.eq.s32.totalorder %s18, 1
    %p162 = por %p160, %p161
    %p163 = scmp.ne.s32.totalorder %s154, %s155
    %p164 = scmp.eq.s32.totalorder %s18, 0
    %p165 = por %p163, %p164
    %p166 = scmp.ne.s32.totalorder %s154, %s155
    %p167 = scmp.eq.s32.totalorder %s19, 1
    %p168 = por %p166, %p167
    %p170 = scmp.ne.s32.totalorder %s155, %s169
    %p171 = scmp.eq.s32.totalorder %s19, 0
    %p172 = por %p170, %p171
    %s173 = ssub.s32 %s13, %s20
    %p174 = scmp.eq.s32.totalorder %s173, 0
    %s176 = sadd.s32 %s175, 1
    %s177 = scalar_select %p174, %s175, %s176
    %p180 = pneg %p174
    %p181 = scmp.eq.s32.totalorder %s13, 1
    %p182 = por %p180, %p181
    %p183 = scmp.ne.s32.totalorder %s175, %s178
    %p184 = scmp.eq.s32.totalorder %s13, 0
    %p185 = por %p183, %p184
    %p186 = scmp.ne.s32.totalorder %s175, %s178
    %p187 = scmp.eq.s32.totalorder %s18, 1
    %p188 = por %p186, %p187
    %p189 = scmp.ne.s32.totalorder %s178, %s179
    %p190 = scmp.eq.s32.totalorder %s18, 0
    %p191 = por %p189, %p190
    %p192 = scmp.ne.s32.totalorder %s178, %s179
    %p193 = scmp.eq.s32.totalorder %s19, 1
    %p194 = por %p192, %p193
    %p196 = scmp.ne.s32.totalorder %s179, %s195
    %p197 = scmp.eq.s32.totalorder %s19, 0
    %p198 = por %p196, %p197
    %p199 = scmp.le.s32.totalorder 1, %s13
    %p200 = scmp.lt.s32.totalorder %s13, 3
    %p201 = pnand %p199, %p200
    %p202 = pneg %p201
    // Predicated region
    $region9: #{tpu_custom_call.1} parent=5 // pred_check
      _
    $region10: #{tpu_custom_call.1} parent=5 // pred_check_branch
      %204 = sbr.rel (%p201) target = $region12
    $region11: #{tpu_custom_call.1} parent=5 // pred_region
      %s205 = ssub.s32 %s13, 1
      // Predicated region
      $region13: #{tpu_custom_call.1} parent=11 // pred_check
        %p206 = pneg %p60
      $region14: #{tpu_custom_call.1} parent=11 // pred_check_branch
        %208 = sbr.rel (%p206) target = $region16
      $region15: #{tpu_custom_call.1} parent=11 // pred_region
        _
      $region16: #{tpu_custom_call.1} parent=11 // pred_fallthru
        _
      // Predicated region
      $region17: #{tpu_custom_call.1} parent=11 // pred_check
        %p209 = pneg %p81
      $region18: #{tpu_custom_call.1} parent=11 // pred_check_branch
        %211 = sbr.rel (%p209) target = $region20
      $region19: #{tpu_custom_call.1} parent=11 // pred_region
        _
      $region20: #{tpu_custom_call.1} parent=11 // pred_fallthru
        _
      // Predicated region
      $region21: #{tpu_custom_call.1} parent=11 // pred_check
        %p212 = pneg %p102
      $region22: #{tpu_custom_call.1} parent=11 // pred_check_branch
        %214 = sbr.rel (%p212) target = $region24
      $region23: #{tpu_custom_call.1} parent=11 // pred_region
        _
      $region24: #{tpu_custom_call.1} parent=11 // pred_fallthru
        _
      // Predicated region
      $region25: #{tpu_custom_call.1} parent=11 // pred_check
        %p215 = pneg %p123
      $region26: #{tpu_custom_call.1} parent=11 // pred_check_branch
        %217 = sbr.rel (%p215) target = $region28
      $region27: #{tpu_custom_call.1} parent=11 // pred_region
        _
      $region28: #{tpu_custom_call.1} parent=11 // pred_fallthru
        _
      // Predicated region
      $region29: #{tpu_custom_call.1} parent=11 // pred_check
        %p218 = pneg %p144
      $region30: #{tpu_custom_call.1} parent=11 // pred_check_branch
        %220 = sbr.rel (%p218) target = $region32
      $region31: #{tpu_custom_call.1} parent=11 // pred_region
        _
      $region32: #{tpu_custom_call.1} parent=11 // pred_fallthru
        _
      // Predicated region
      $region33: #{tpu_custom_call.1} parent=11 // pred_check
        %p221 = pneg %p165
      $region34: #{tpu_custom_call.1} parent=11 // pred_check_branch
        %223 = sbr.rel (%p221) target = $region36
      $region35: #{tpu_custom_call.1} parent=11 // pred_region
        _
      $region36: #{tpu_custom_call.1} parent=11 // pred_fallthru
        _
    $region12: #{tpu_custom_call.1} parent=5 // pred_fallthru
      _
    %p224 = scmp.lt.s32.totalorder %s13, 2
    // Predicated region
    $region37: #{tpu_custom_call.1} parent=5 // pred_check
      %p225 = pneg %p224
    $region38: #{tpu_custom_call.1} parent=5 // pred_check_branch
      %227 = sbr.rel (%p225) target = $region40
    $region39: #{tpu_custom_call.1} parent=5 // pred_region
      // Predicated region
      $region41: #{tpu_custom_call.1} parent=39 // pred_check
        %p228 = pneg %p33
      $region42: #{tpu_custom_call.1} parent=39 // pred_check_branch
        %230 = sbr.rel (%p228) target = $region44
      $region43: #{tpu_custom_call.1} parent=39 // pred_region
        %s231 = smul.u32 16, %s13
        %p232 = scmp.lt.s32.totalorder %s231, 31
        %s233 = scalar_select %p232, %s231, 31
        %s234 = smul.addr %s233, 8
        %s235 = scalar_lea.vmem %s0, %s234
        %s236 = smul.u32 16, %s13
      $region44: #{tpu_custom_call.1} parent=39 // pred_fallthru
        _
    $region40: #{tpu_custom_call.1} parent=5 // pred_fallthru
      _
    %p237 = scmp.le.s32.totalorder 1, %s13
    %p238 = scmp.lt.s32.totalorder %s13, 3
    %p239 = pnand %p237, %p238
    %p240 = pneg %p239
    // Predicated region
    $region45: #{tpu_custom_call.1} parent=5 // pred_check
      _
    $region46: #{tpu_custom_call.1} parent=5 // pred_check_branch
      %242 = sbr.rel (%p239) target = $region48
    $region47: #{tpu_custom_call.1} parent=5 // pred_region
      %s243 = ssub.s32 %s13, 1
      %s244 = smul.u32 16, %s18
      %p245 = scmp.lt.s32.totalorder %s244, 31
      %s246 = scalar_select %p245, %s244, 31
      %s247 = smul.addr %s246, 8
      %s248 = scalar_lea.vmem %s0, %s247
      %p249 = pneg %p39
      %p250 = pneg %p36
      %p251 = pneg %p60
      %p252 = pneg %p57
      %p253 = pneg %p81
      %p254 = pneg %p78
      %p255 = pneg %p102
      %p256 = pneg %p99
      %p257 = pneg %p123
      %p258 = pneg %p120
      %p259 = pneg %p144
      %p260 = pneg %p141
      %p261 = pneg %p165
      %p262 = pneg %p162
      %p263 = pneg %p191
      %p264 = pneg %p188
      %s265 = smul.u32 16, %s18
      %p266 = scmp.lt.s32.totalorder %s265, 31
      %s267 = scalar_select %p266, %s265, 31
      %s268 = smul.addr %s267, 8
      %s269 = scalar_lea.vmem %s7, %s268
      %s270 = smul.u32 16, %s18
      %p271 = scmp.lt.s32.totalorder %s270, 31
      %s272 = scalar_select %p271, %s270, 31
      %s273 = smul.addr %s272, 8
      %s274 = scalar_lea.vmem %s0, %s273
      %s275 = smul.u32 16, %s18
      %s276 = smul.u32 16, %s18
      %p277 = scmp.lt.s32.totalorder %s276, 31
      %s278 = scalar_select %p277, %s276, 31
      %s279 = smul.addr %s278, 8
      %s280 = scalar_lea.vmem %s7, %s279
      %s281 = smul.u32 16, %s18
      %v282 = vld [vmem:[%s274] sm:$0xff]
      %v283 = vld [vmem:[%s274 + $0x8] sm:$0xff]
      %v284 = vld [vmem:[%s274 + $0x10] sm:$0xff]
      %v285 = vld [vmem:[%s274 + $0x18] sm:$0xff]
      %v286 = vld [vmem:[%s274 + $0x20] sm:$0xff]
      %v287 = vld [vmem:[%s274 + $0x28] sm:$0xff]
      %v288 = vld [vmem:[%s274 + $0x30] sm:$0xff]
      %v289 = vld [vmem:[%s274 + $0x38] sm:$0xff]
      %v290 = vld [vmem:[%s274 + $0x40] sm:$0xff]
      %v291 = vld [vmem:[%s274 + $0x48] sm:$0xff]
      %v292 = vld [vmem:[%s274 + $0x50] sm:$0xff]
      %v293 = vld [vmem:[%s274 + $0x58] sm:$0xff]
      %v294 = vld [vmem:[%s274 + $0x60] sm:$0xff]
      %v295 = vld [vmem:[%s274 + $0x68] sm:$0xff]
      %v296 = vld [vmem:[%s274 + $0x70] sm:$0xff]
      %v297 = vld [vmem:[%s274 + $0x78] sm:$0xff]
      %v298 = vld [vmem:[%s1] sm:$0xff]
      %v299 = vld [vmem:[%s1 + $0x8] sm:$0xff]
      %v300 = vld [vmem:[%s2] sm:$0x1]
      %v302 = vlaneseq
      %v303 = vshrl.u32 %v302, 7
      %v304 = vsub.s32 0, %v303
      %v305 = vrot.slane %v300, %v304
      %vm307 = vcmask 130048
      %v309 = vsel %vm307, %v282, 0
      %v312 = vsel %vm307, %v283, 0
      %v315 = vsel %vm307, %v284, 0
      %v318 = vsel %vm307, %v285, 0
      %v321 = vsel %vm307, %v286, 0
      %v324 = vsel %vm307, %v287, 0
      %v327 = vsel %vm307, %v288, 0
      %v330 = vsel %vm307, %v289, 0
      %v333 = vsel %vm307, %v290, 0
      %v336 = vsel %vm307, %v291, 0
      %v339 = vsel %vm307, %v292, 0
      %v342 = vsel %vm307, %v293, 0
      %v345 = vsel %vm307, %v294, 0
      %v348 = vsel %vm307, %v295, 0
      %v351 = vsel %vm307, %v296, 0
      %v354 = vsel %vm307, %v297, 0
      %356 = vmatprep.subr.mxu0 0.0
      %357 = vmatpush1.msra.mxu0 %v298
      %358 = vmatprep.subr.mxu0 0.0
      %359 = vmatpush1.msra.mxu0 %v299
      %360 = vmatprep.subr.mxu0 0.0
      %361 = vmatpush1.msra.mxu0 0.0
      %362 = vmatprep.subr.mxu0 0.0
      %363 = vmatpush1.msra.mxu0 0.0
      %364 = vmatprep.subr.mxu0 0.0
      %365 = vmatpush1.msra.mxu0 0.0
      %366 = vmatprep.subr.mxu0 0.0
      %367 = vmatpush1.msra.mxu0 0.0
      %368 = vmatprep.subr.mxu0 0.0
      %369 = vmatpush1.msra.mxu0 0.0
      %370 = vmatprep.subr.mxu0 0.0
      %371 = vmatpush1.msra.mxu0 0.0
      %372 = vmatprep.subr.mxu0 0.0
      %373 = vmatpush1.msra.mxu0 0.0
      %374 = vmatprep.subr.mxu0 0.0
      %375 = vmatpush1.msra.mxu0 0.0
      %376 = vmatprep.subr.mxu0 0.0
      %377 = vmatpush1.msra.mxu0 0.0
      %378 = vmatprep.subr.mxu0 0.0
      %379 = vmatpush1.msra.mxu0 0.0
      %380 = vmatprep.subr.mxu0 0.0
      %381 = vmatpush1.msra.mxu0 0.0
      %382 = vmatprep.subr.mxu0 0.0
      %383 = vmatpush1.msra.mxu0 0.0
      %384 = vmatprep.subr.mxu0 0.0
      %385 = vmatpush1.msra.mxu0 0.0
      %386 = vmatprep.subr.mxu0 0.0
      %387 = vmatpush1.msra.mxu0 0.0
      %388 = vmatprep.subr.mxu0 0.0
      %389 = vmatpush1.msra.mxu0 0.0
      %390 = vmatprep.subr.mxu0 0.0
      %391 = vmatpush1.msra.mxu0 0.0
      %392 = vmatprep.subr.mxu0 0.0
      %393 = vmatpush1.msra.mxu0 0.0
      %394 = vmatprep.subr.mxu0 0.0
      %395 = vmatpush1.msra.mxu0 0.0
      %396 = vmatprep.subr.mxu0 0.0
      %397 = vmatpush1.msra.mxu0 0.0
      %398 = vmatprep.subr.mxu0 0.0
      %399 = vmatpush1.msra.mxu0 0.0
      %400 = vmatprep.subr.mxu0 0.0
      %401 = vmatpush1.msra.mxu0 0.0
      %402 = vmatprep.subr.mxu0 0.0
      %403 = vmatpush1.msra.mxu0 0.0
      %404 = vmatprep.subr.mxu0 0.0
      %405 = vmatpush1.msra.mxu0 0.0
      %406 = vmatprep.subr.mxu0 0.0
      %407 = vmatpush1.msra.mxu0 0.0
      %408 = vmatprep.subr.mxu0 0.0
      %409 = vmatpush1.msra.mxu0 0.0
      %410 = vmatprep.subr.mxu0 0.0
      %411 = vmatpush1.msra.mxu0 0.0
      %412 = vmatprep.subr.mxu0 0.0
      %413 = vmatpush1.msra.mxu0 0.0
      %414 = vmatprep.subr.mxu0 0.0
      %415 = vmatpush1.msra.mxu0 0.0
      %416 = vmatprep.subr.mxu0 0.0
      %417 = vmatpush1.msra.mxu0 0.0
      %418 = vmatprep.subr.mxu0 0.0
      %419 = vmatpush1.msra.mxu0 0.0
      %420 = vmatprep.mubr.f32.mxu0 0.0
      %421 = vmatmul.mubr.f32.gmra.mrb[0].mxu0 %v309
      %v422 = vpop.f32.mrb[0].mxu0
      %v423 = vadd.f32 %v305, %v422
      %v424 = vpop.f32.mrb[0].mxu0
      %425 = vmatprep.mubr.f32.mxu0 0.0
      %426 = vmatmul.mubr.f32.gmra.mrb[0].mxu0 %v312
      %v427 = vpop.f32.mrb[0].mxu0
      %v428 = vadd.f32 %v305, %v427
      %v429 = vpop.f32.mrb[0].mxu0
      %430 = vmatprep.mubr.f32.mxu0 0.0
      %431 = vmatmul.mubr.f32.gmra.mrb[0].mxu0 %v315
      %v432 = vpop.f32.mrb[0].mxu0
      %v433 = vadd.f32 %v305, %v432
      %v434 = vpop.f32.mrb[0].mxu0
      %435 = vmatprep.mubr.f32.mxu0 0.0
      %436 = vmatmul.mubr.f32.gmra.mrb[0].mxu0 %v318
      %v437 = vpop.f32.mrb[0].mxu0
      %v438 = vadd.f32 %v305, %v437
      %v439 = vpop.f32.mrb[0].mxu0
      %440 = vmatprep.mubr.f32.mxu0 0.0
      %441 = vmatmul.mubr.f32.gmra.mrb[0].mxu0 %v321
      %v442 = vpop.f32.mrb[0].mxu0
      %v443 = vadd.f32 %v305, %v442
      %v444 = vpop.f32.mrb[0].mxu0
      %445 = vmatprep.mubr.f32.mxu0 0.0
      %446 = vmatmul.mubr.f32.gmra.mrb[0].mxu0 %v324
      %v447 = vpop.f32.mrb[0].mxu0
      %v448 = vadd.f32 %v305, %v447
      %v449 = vpop.f32.mrb[0].mxu0
      %450 = vmatprep.mubr.f32.mxu0 0.0
      %451 = vmatmul.mubr.f32.gmra.mrb[0].mxu0 %v327
      %v452 = vpop.f32.mrb[0].mxu0
      %v453 = vadd.f32 %v305, %v452
      %v454 = vpop.f32.mrb[0].mxu0
      %455 = vmatprep.mubr.f32.mxu0 0.0
      %456 = vmatmul.mubr.f32.gmra.mrb[0].mxu0 %v330
      %v457 = vpop.f32.mrb[0].mxu0
      %v458 = vadd.f32 %v305, %v457
      %v459 = vpop.f32.mrb[0].mxu0
      %460 = vmatprep.mubr.f32.mxu0 0.0
      %461 = vmatmul.mubr.f32.gmra.mrb[0].mxu0 %v333
      %v462 = vpop.f32.mrb[0].mxu0
      %v463 = vadd.f32 %v305, %v462
      %v464 = vpop.f32.mrb[0].mxu0
      %465 = vmatprep.mubr.f32.mxu0 0.0
      %466 = vmatmul.mubr.f32.gmra.mrb[0].mxu0 %v336
      %v467 = vpop.f32.mrb[0].mxu0
      %v468 = vadd.f32 %v305, %v467
      %v469 = vpop.f32.mrb[0].mxu0
      %470 = vmatprep.mubr.f32.mxu0 0.0
      %471 = vmatmul.mubr.f32.gmra.mrb[0].mxu0 %v339
      %v472 = vpop.f32.mrb[0].mxu0
      %v473 = vadd.f32 %v305, %v472
      %v474 = vpop.f32.mrb[0].mxu0
      %475 = vmatprep.mubr.f32.mxu0 0.0
      %476 = vmatmul.mubr.f32.gmra.mrb[0].mxu0 %v342
      %v477 = vpop.f32.mrb[0].mxu0
      %v478 = vadd.f32 %v305, %v477
      %v479 = vpop.f32.mrb[0].mxu0
      %480 = vmatprep.mubr.f32.mxu0 0.0
      %481 = vmatmul.mubr.f32.gmra.mrb[0].mxu0 %v345
      %v482 = vpop.f32.mrb[0].mxu0
      %v483 = vadd.f32 %v305, %v482
      %v484 = vpop.f32.mrb[0].mxu0
      %485 = vmatprep.mubr.f32.mxu0 0.0
      %486 = vmatmul.mubr.f32.gmra.mrb[0].mxu0 %v348
      %v487 = vpop.f32.mrb[0].mxu0
      %v488 = vadd.f32 %v305, %v487
      %v489 = vpop.f32.mrb[0].mxu0
      %490 = vmatprep.mubr.f32.mxu0 0.0
      %491 = vmatmul.mubr.f32.gmra.mrb[0].mxu0 %v351
      %v492 = vpop.f32.mrb[0].mxu0
      %v493 = vadd.f32 %v305, %v492
      %v494 = vpop.f32.mrb[0].mxu0
      %495 = vmatprep.mubr.f32.mxu0 0.0
      %496 = vmatmul.mubr.f32.gmra.mrb[0].mxu0 %v354
      %v497 = vpop.f32.mrb[0].mxu0
      %v498 = vadd.f32 %v305, %v497
      %v499 = vpop.f32.mrb[0].mxu0
      %500 = vdwg.mxu0
      %v501 = vmax.f32 %v423, 0.0
      %v502 = vmax.f32 %v428, 0.0
      %v503 = vmax.f32 %v433, 0.0
      %v504 = vmax.f32 %v438, 0.0
      %v505 = vmax.f32 %v443, 0.0
      %v506 = vmax.f32 %v448, 0.0
      %v507 = vmax.f32 %v453, 0.0
      %v508 = vmax.f32 %v458, 0.0
      %v509 = vmax.f32 %v463, 0.0
      %v510 = vmax.f32 %v468, 0.0
      %v511 = vmax.f32 %v473, 0.0
      %v512 = vmax.f32 %v478, 0.0
      %v513 = vmax.f32 %v483, 0.0
      %v514 = vmax.f32 %v488, 0.0
      %v515 = vmax.f32 %v493, 0.0
      %v516 = vmax.f32 %v498, 0.0
      %v517 = vld [vmem:[%s3] sm:$0xff]
      %v518 = vld [vmem:[%s3 + $0x8] sm:$0xff]
      %v519 = vld [vmem:[%s3 + $0x10] sm:$0xff]
      %v520 = vld [vmem:[%s3 + $0x18] sm:$0xff]
      %v521 = vld [vmem:[%s3 + $0x20] sm:$0xff]
      %v522 = vld [vmem:[%s3 + $0x28] sm:$0xff]
      %v523 = vld [vmem:[%s3 + $0x30] sm:$0xff]
      %v524 = vld [vmem:[%s3 + $0x38] sm:$0xff]
      %v525 = vld [vmem:[%s4] sm:$0x1]
      %v527 = vlaneseq
      %v528 = vshrl.u32 %v527, 7
      %v529 = vsub.s32 0, %v528
      %v530 = vrot.slane %v525, %v529
      %vm532 = vcmask 523264
      %v534 = vsel %vm532, %v501, 0
      %v537 = vsel %vm532, %v502, 0
      %v540 = vsel %vm532, %v503, 0
      %v543 = vsel %vm532, %v504, 0
      %v546 = vsel %vm532, %v505, 0
      %v549 = vsel %vm532, %v506, 0
      %v552 = vsel %vm532, %v507, 0
      %v555 = vsel %vm532, %v508, 0
      %v558 = vsel %vm532, %v509, 0
      %v561 = vsel %vm532, %v510, 0
      %v564 = vsel %vm532, %v511, 0
      %v567 = vsel %vm532, %v512, 0
      %v570 = vsel %vm532, %v513, 0
      %v573 = vsel %vm532, %v514, 0
      %v576 = vsel %vm532, %v515, 0
      %v579 = vsel %vm532, %v516, 0
      %581 = vmatprep.subr.mxu0 0.0
      %582 = vmatpush1.msra.mxu0 %v517
      %583 = vmatprep.subr.mxu0 0.0
      %584 = vmatpush1.msra.mxu0 %v518
      %585 = vmatprep.subr.mxu0 0.0
      %586 = vmatpush1.msra.mxu0 %v519
      %587 = vmatprep.subr.mxu0 0.0
      %588 = vmatpush1.msra.mxu0 %v520
      %589 = vmatprep.subr.mxu0 0.0
      %590 = vmatpush1.msra.mxu0 %v521
      %591 = vmatprep.subr.mxu0 0.0
      %592 = vmatpush1.msra.mxu0 %v522
      %593 = vmatprep.subr.mxu0 0.0
      %594 = vmatpush1.msra.mxu0 %v523
      %595 = vmatprep.subr.mxu0 0.0
      %596 = vmatpush1.msra.mxu0 %v524
      %597 = vmatprep.subr.mxu0 0.0
      %598 = vmatpush1.msra.mxu0 0.0
      %599 = vmatprep.subr.mxu0 0.0
      %600 = vmatpush1.msra.mxu0 0.0
      %601 = vmatprep.subr.mxu0 0.0
      %602 = vmatpush1.msra.mxu0 0.0
      %603 = vmatprep.subr.mxu0 0.0
      %604 = vmatpush1.msra.mxu0 0.0
      %605 = vmatprep.subr.mxu0 0.0
      %606 = vmatpush1.msra.mxu0 0.0
      %607 = vmatprep.subr.mxu0 0.0
      %608 = vmatpush1.msra.mxu0 0.0
      %609 = vmatprep.subr.mxu0 0.0
      %610 = vmatpush1.msra.mxu0 0.0
      %611 = vmatprep.subr.mxu0 0.0
      %612 = vmatpush1.msra.mxu0 0.0
      %613 = vmatprep.subr.mxu0 0.0
      %614 = vmatpush1.msra.mxu0 0.0
      %615 = vmatprep.subr.mxu0 0.0
      %616 = vmatpush1.msra.mxu0 0.0
      %617 = vmatprep.subr.mxu0 0.0
      %618 = vmatpush1.msra.mxu0 0.0
      %619 = vmatprep.subr.mxu0 0.0
      %620 = vmatpush1.msra.mxu0 0.0
      %621 = vmatprep.subr.mxu0 0.0
      %622 = vmatpush1.msra.mxu0 0.0
      %623 = vmatprep.subr.mxu0 0.0
      %624 = vmatpush1.msra.mxu0 0.0
      %625 = vmatprep.subr.mxu0 0.0
      %626 = vmatpush1.msra.mxu0 0.0
      %627 = vmatprep.subr.mxu0 0.0
      %628 = vmatpush1.msra.mxu0 0.0
      %629 = vmatprep.subr.mxu0 0.0
      %630 = vmatpush1.msra.mxu0 0.0
      %631 = vmatprep.subr.mxu0 0.0
      %632 = vmatpush1.msra.mxu0 0.0
      %633 = vmatprep.subr.mxu0 0.0
      %634 = vmatpush1.msra.mxu0 0.0
      %635 = vmatprep.subr.mxu0 0.0
      %636 = vmatpush1.msra.mxu0 0.0
      %637 = vmatprep.subr.mxu0 0.0
      %638 = vmatpush1.msra.mxu0 0.0
      %639 = vmatprep.subr.mxu0 0.0
      %640 = vmatpush1.msra.mxu0 0.0
      %641 = vmatprep.subr.mxu0 0.0
      %642 = vmatpush1.msra.mxu0 0.0
      %643 = vmatprep.subr.mxu0 0.0
      %644 = vmatpush1.msra.mxu0 0.0
      %645 = vmatprep.mubr.f32.mxu0 0.0
      %646 = vmatmul.mubr.f32.gmra.mrb[0].mxu0 %v534
      %v647 = vpop.f32.mrb[0].mxu0
      %v648 = vadd.f32 %v530, %v647
      %v649 = vpop.f32.mrb[0].mxu0
      %650 = vmatprep.mubr.f32.mxu0 0.0
      %651 = vmatmul.mubr.f32.gmra.mrb[0].mxu0 %v537
      %v652 = vpop.f32.mrb[0].mxu0
      %v653 = vadd.f32 %v530, %v652
      %v654 = vpop.f32.mrb[0].mxu0
      %655 = vmatprep.mubr.f32.mxu0 0.0
      %656 = vmatmul.mubr.f32.gmra.mrb[0].mxu0 %v540
      %v657 = vpop.f32.mrb[0].mxu0
      %v658 = vadd.f32 %v530, %v657
      %v659 = vpop.f32.mrb[0].mxu0
      %660 = vmatprep.mubr.f32.mxu0 0.0
      %661 = vmatmul.mubr.f32.gmra.mrb[0].mxu0 %v543
      %v662 = vpop.f32.mrb[0].mxu0
      %v663 = vadd.f32 %v530, %v662
      %v664 = vpop.f32.mrb[0].mxu0
      %665 = vmatprep.mubr.f32.mxu0 0.0
      %666 = vmatmul.mubr.f32.gmra.mrb[0].mxu0 %v546
      %v667 = vpop.f32.mrb[0].mxu0
      %v668 = vadd.f32 %v530, %v667
      %v669 = vpop.f32.mrb[0].mxu0
      %670 = vmatprep.mubr.f32.mxu0 0.0
      %671 = vmatmul.mubr.f32.gmra.mrb[0].mxu0 %v549
      %v672 = vpop.f32.mrb[0].mxu0
      %v673 = vadd.f32 %v530, %v672
      %v674 = vpop.f32.mrb[0].mxu0
      %675 = vmatprep.mubr.f32.mxu0 0.0
      %676 = vmatmul.mubr.f32.gmra.mrb[0].mxu0 %v552
      %v677 = vpop.f32.mrb[0].mxu0
      %v678 = vadd.f32 %v530, %v677
      %v679 = vpop.f32.mrb[0].mxu0
      %680 = vmatprep.mubr.f32.mxu0 0.0
      %681 = vmatmul.mubr.f32.gmra.mrb[0].mxu0 %v555
      %v682 = vpop.f32.mrb[0].mxu0
      %v683 = vadd.f32 %v530, %v682
      %v684 = vpop.f32.mrb[0].mxu0
      %685 = vmatprep.mubr.f32.mxu0 0.0
      %686 = vmatmul.mubr.f32.gmra.mrb[0].mxu0 %v558
      %v687 = vpop.f32.mrb[0].mxu0
      %v688 = vadd.f32 %v530, %v687
      %v689 = vpop.f32.mrb[0].mxu0
      %690 = vmatprep.mubr.f32.mxu0 0.0
      %691 = vmatmul.mubr.f32.gmra.mrb[0].mxu0 %v561
      %v692 = vpop.f32.mrb[0].mxu0
      %v693 = vadd.f32 %v530, %v692
      %v694 = vpop.f32.mrb[0].mxu0
      %695 = vmatprep.mubr.f32.mxu0 0.0
      %696 = vmatmul.mubr.f32.gmra.mrb[0].mxu0 %v564
      %v697 = vpop.f32.mrb[0].mxu0
      %v698 = vadd.f32 %v530, %v697
      %v699 = vpop.f32.mrb[0].mxu0
      %700 = vmatprep.mubr.f32.mxu0 0.0
      %701 = vmatmul.mubr.f32.gmra.mrb[0].mxu0 %v567
      %v702 = vpop.f32.mrb[0].mxu0
      %v703 = vadd.f32 %v530, %v702
      %v704 = vpop.f32.mrb[0].mxu0
      %705 = vmatprep.mubr.f32.mxu0 0.0
      %706 = vmatmul.mubr.f32.gmra.mrb[0].mxu0 %v570
      %v707 = vpop.f32.mrb[0].mxu0
      %v708 = vadd.f32 %v530, %v707
      %v709 = vpop.f32.mrb[0].mxu0
      %710 = vmatprep.mubr.f32.mxu0 0.0
      %711 = vmatmul.mubr.f32.gmra.mrb[0].mxu0 %v573
      %v712 = vpop.f32.mrb[0].mxu0
      %v713 = vadd.f32 %v530, %v712
      %v714 = vpop.f32.mrb[0].mxu0
      %715 = vmatprep.mubr.f32.mxu0 0.0
      %716 = vmatmul.mubr.f32.gmra.mrb[0].mxu0 %v576
      %v717 = vpop.f32.mrb[0].mxu0
      %v718 = vadd.f32 %v530, %v717
      %v719 = vpop.f32.mrb[0].mxu0
      %720 = vmatprep.mubr.f32.mxu0 0.0
      %721 = vmatmul.mubr.f32.gmra.mrb[0].mxu0 %v579
      %v722 = vpop.f32.mrb[0].mxu0
      %v723 = vadd.f32 %v530, %v722
      %v724 = vpop.f32.mrb[0].mxu0
      %725 = vdwg.mxu0
      %v726 = vmax.f32 %v648, 0.0
      %v727 = vmax.f32 %v653, 0.0
      %v728 = vmax.f32 %v658, 0.0
      %v729 = vmax.f32 %v663, 0.0
      %v730 = vmax.f32 %v668, 0.0
      %v731 = vmax.f32 %v673, 0.0
      %v732 = vmax.f32 %v678, 0.0
      %v733 = vmax.f32 %v683, 0.0
      %v734 = vmax.f32 %v688, 0.0
      %v735 = vmax.f32 %v693, 0.0
      %v736 = vmax.f32 %v698, 0.0
      %v737 = vmax.f32 %v703, 0.0
      %v738 = vmax.f32 %v708, 0.0
      %v739 = vmax.f32 %v713, 0.0
      %v740 = vmax.f32 %v718, 0.0
      %v741 = vmax.f32 %v723, 0.0
      %v742 = vld [vmem:[%s5] sm:$0xff]
      %v743 = vld [vmem:[%s5 + $0x8] sm:$0xff]
      %v744 = vld [vmem:[%s5 + $0x10] sm:$0xff]
      %v745 = vld [vmem:[%s5 + $0x18] sm:$0xff]
      %v746 = vld [vmem:[%s6] sm:$0x1]
      %v748 = vlaneseq
      %v749 = vshrl.u32 %v748, 7
      %v750 = vsub.s32 0, %v749
      %v751 = vrot.slane %v746, %v750
      %vm753 = vcmask 261120
      %v755 = vsel %vm753, %v726, 0
      %v758 = vsel %vm753, %v727, 0
      %v761 = vsel %vm753, %v728, 0
      %v764 = vsel %vm753, %v729, 0
      %v767 = vsel %vm753, %v730, 0
      %v770 = vsel %vm753, %v731, 0
      %v773 = vsel %vm753, %v732, 0
      %v776 = vsel %vm753, %v733, 0
      %v779 = vsel %vm753, %v734, 0
      %v782 = vsel %vm753, %v735, 0
      %v785 = vsel %vm753, %v736, 0
      %v788 = vsel %vm753, %v737, 0
      %v791 = vsel %vm753, %v738, 0
      %v794 = vsel %vm753, %v739, 0
      %v797 = vsel %vm753, %v740, 0
      %v800 = vsel %vm753, %v741, 0
      %802 = vmatprep.subr.mxu0 0.0
      %803 = vmatpush1.msra.mxu0 %v742
      %804 = vmatprep.subr.mxu0 0.0
      %805 = vmatpush1.msra.mxu0 %v743
      %806 = vmatprep.subr.mxu0 0.0
      %807 = vmatpush1.msra.mxu0 %v744
      %808 = vmatprep.subr.mxu0 0.0
      %809 = vmatpush1.msra.mxu0 %v745
      %810 = vmatprep.subr.mxu0 0.0
      %811 = vmatpush1.msra.mxu0 0.0
      %812 = vmatprep.subr.mxu0 0.0
      %813 = vmatpush1.msra.mxu0 0.0
      %814 = vmatprep.subr.mxu0 0.0
      %815 = vmatpush1.msra.mxu0 0.0
      %816 = vmatprep.subr.mxu0 0.0
      %817 = vmatpush1.msra.mxu0 0.0
      %818 = vmatprep.subr.mxu0 0.0
      %819 = vmatpush1.msra.mxu0 0.0
      %820 = vmatprep.subr.mxu0 0.0
      %821 = vmatpush1.msra.mxu0 0.0
      %822 = vmatprep.subr.mxu0 0.0
      %823 = vmatpush1.msra.mxu0 0.0
      %824 = vmatprep.subr.mxu0 0.0
      %825 = vmatpush1.msra.mxu0 0.0
      %826 = vmatprep.subr.mxu0 0.0
      %827 = vmatpush1.msra.mxu0 0.0
      %828 = vmatprep.subr.mxu0 0.0
      %829 = vmatpush1.msra.mxu0 0.0
      %830 = vmatprep.subr.mxu0 0.0
      %831 = vmatpush1.msra.mxu0 0.0
      %832 = vmatprep.subr.mxu0 0.0
      %833 = vmatpush1.msra.mxu0 0.0
      %834 = vmatprep.subr.mxu0 0.0
      %835 = vmatpush1.msra.mxu0 0.0
      %836 = vmatprep.subr.mxu0 0.0
      %837 = vmatpush1.msra.mxu0 0.0
      %838 = vmatprep.subr.mxu0 0.0
      %839 = vmatpush1.msra.mxu0 0.0
      %840 = vmatprep.subr.mxu0 0.0
      %841 = vmatpush1.msra.mxu0 0.0
      %842 = vmatprep.subr.mxu0 0.0
      %843 = vmatpush1.msra.mxu0 0.0
      %844 = vmatprep.subr.mxu0 0.0
      %845 = vmatpush1.msra.mxu0 0.0
      %846 = vmatprep.subr.mxu0 0.0
      %847 = vmatpush1.msra.mxu0 0.0
      %848 = vmatprep.subr.mxu0 0.0
      %849 = vmatpush1.msra.mxu0 0.0
      %850 = vmatprep.subr.mxu0 0.0
      %851 = vmatpush1.msra.mxu0 0.0
      %852 = vmatprep.subr.mxu0 0.0
      %853 = vmatpush1.msra.mxu0 0.0
      %854 = vmatprep.subr.mxu0 0.0
      %855 = vmatpush1.msra.mxu0 0.0
      %856 = vmatprep.subr.mxu0 0.0
      %857 = vmatpush1.msra.mxu0 0.0
      %858 = vmatprep.subr.mxu0 0.0
      %859 = vmatpush1.msra.mxu0 0.0
      %860 = vmatprep.subr.mxu0 0.0
      %861 = vmatpush1.msra.mxu0 0.0
      %862 = vmatprep.subr.mxu0 0.0
      %863 = vmatpush1.msra.mxu0 0.0
      %864 = vmatprep.subr.mxu0 0.0
      %865 = vmatpush1.msra.mxu0 0.0
      %866 = vmatprep.mubr.f32.mxu0 0.0
      %867 = vmatmul.mubr.f32.gmra.mrb[0].mxu0 %v755
      %v868 = vpop.f32.mrb[0].mxu0
      %v869 = vadd.f32 %v751, %v868
      %v870 = vpop.f32.mrb[0].mxu0
      %871 = vmatprep.mubr.f32.mxu0 0.0
      %872 = vmatmul.mubr.f32.gmra.mrb[0].mxu0 %v758
      %v873 = vpop.f32.mrb[0].mxu0
      %v874 = vadd.f32 %v751, %v873
      %v875 = vpop.f32.mrb[0].mxu0
      %876 = vmatprep.mubr.f32.mxu0 0.0
      %877 = vmatmul.mubr.f32.gmra.mrb[0].mxu0 %v761
      %v878 = vpop.f32.mrb[0].mxu0
      %v879 = vadd.f32 %v751, %v878
      %v880 = vpop.f32.mrb[0].mxu0
      %881 = vmatprep.mubr.f32.mxu0 0.0
      %882 = vmatmul.mubr.f32.gmra.mrb[0].mxu0 %v764
      %v883 = vpop.f32.mrb[0].mxu0
      %v884 = vadd.f32 %v751, %v883
      %v885 = vpop.f32.mrb[0].mxu0
      %886 = vmatprep.mubr.f32.mxu0 0.0
      %887 = vmatmul.mubr.f32.gmra.mrb[0].mxu0 %v767
      %v888 = vpop.f32.mrb[0].mxu0
      %v889 = vadd.f32 %v751, %v888
      %v890 = vpop.f32.mrb[0].mxu0
      %891 = vmatprep.mubr.f32.mxu0 0.0
      %892 = vmatmul.mubr.f32.gmra.mrb[0].mxu0 %v770
      %v893 = vpop.f32.mrb[0].mxu0
      %v894 = vadd.f32 %v751, %v893
      %v895 = vpop.f32.mrb[0].mxu0
      %896 = vmatprep.mubr.f32.mxu0 0.0
      %897 = vmatmul.mubr.f32.gmra.mrb[0].mxu0 %v773
      %v898 = vpop.f32.mrb[0].mxu0
      %v899 = vadd.f32 %v751, %v898
      %v900 = vpop.f32.mrb[0].mxu0
      %901 = vmatprep.mubr.f32.mxu0 0.0
      %902 = vmatmul.mubr.f32.gmra.mrb[0].mxu0 %v776
      %v903 = vpop.f32.mrb[0].mxu0
      %v904 = vadd.f32 %v751, %v903
      %v905 = vpop.f32.mrb[0].mxu0
      %906 = vmatprep.mubr.f32.mxu0 0.0
      %907 = vmatmul.mubr.f32.gmra.mrb[0].mxu0 %v779
      %v908 = vpop.f32.mrb[0].mxu0
      %v909 = vadd.f32 %v751, %v908
      %v910 = vpop.f32.mrb[0].mxu0
      %911 = vmatprep.mubr.f32.mxu0 0.0
      %912 = vmatmul.mubr.f32.gmra.mrb[0].mxu0 %v782
      %v913 = vpop.f32.mrb[0].mxu0
      %v914 = vadd.f32 %v751, %v913
      %v915 = vpop.f32.mrb[0].mxu0
      %916 = vmatprep.mubr.f32.mxu0 0.0
      %917 = vmatmul.mubr.f32.gmra.mrb[0].mxu0 %v785
      %v918 = vpop.f32.mrb[0].mxu0
      %v919 = vadd.f32 %v751, %v918
      %v920 = vpop.f32.mrb[0].mxu0
      %921 = vmatprep.mubr.f32.mxu0 0.0
      %922 = vmatmul.mubr.f32.gmra.mrb[0].mxu0 %v788
      %v923 = vpop.f32.mrb[0].mxu0
      %v924 = vadd.f32 %v751, %v923
      %v925 = vpop.f32.mrb[0].mxu0
      %926 = vmatprep.mubr.f32.mxu0 0.0
      %927 = vmatmul.mubr.f32.gmra.mrb[0].mxu0 %v791
      %v928 = vpop.f32.mrb[0].mxu0
      %v929 = vadd.f32 %v751, %v928
      %v930 = vpop.f32.mrb[0].mxu0
      %931 = vmatprep.mubr.f32.mxu0 0.0
      %932 = vmatmul.mubr.f32.gmra.mrb[0].mxu0 %v794
      %v933 = vpop.f32.mrb[0].mxu0
      %v934 = vadd.f32 %v751, %v933
      %v935 = vpop.f32.mrb[0].mxu0
      %936 = vmatprep.mubr.f32.mxu0 0.0
      %937 = vmatmul.mubr.f32.gmra.mrb[0].mxu0 %v797
      %v938 = vpop.f32.mrb[0].mxu0
      %v939 = vadd.f32 %v751, %v938
      %v940 = vpop.f32.mrb[0].mxu0
      %941 = vmatprep.mubr.f32.mxu0 0.0
      %942 = vmatmul.mubr.f32.gmra.mrb[0].mxu0 %v800
      %v943 = vpop.f32.mrb[0].mxu0
      %v944 = vadd.f32 %v751, %v943
      %v945 = vpop.f32.mrb[0].mxu0
      %946 = vdwg.mxu0
      %vm947 = vcmask 31744
      %948 = vst.msk [vmem:[%s280] sm:$0xff] %vm947, %v869
      %949 = vst.msk [vmem:[%s280 + $0x8] sm:$0xff] %vm947, %v874
      %950 = vst.msk [vmem:[%s280 + $0x10] sm:$0xff] %vm947, %v879
      %951 = vst.msk [vmem:[%s280 + $0x18] sm:$0xff] %vm947, %v884
      %952 = vst.msk [vmem:[%s280 + $0x20] sm:$0xff] %vm947, %v889
      %953 = vst.msk [vmem:[%s280 + $0x28] sm:$0xff] %vm947, %v894
      %954 = vst.msk [vmem:[%s280 + $0x30] sm:$0xff] %vm947, %v899
      %955 = vst.msk [vmem:[%s280 + $0x38] sm:$0xff] %vm947, %v904
      %956 = vst.msk [vmem:[%s280 + $0x40] sm:$0xff] %vm947, %v909
      %957 = vst.msk [vmem:[%s280 + $0x48] sm:$0xff] %vm947, %v914
      %958 = vst.msk [vmem:[%s280 + $0x50] sm:$0xff] %vm947, %v919
      %959 = vst.msk [vmem:[%s280 + $0x58] sm:$0xff] %vm947, %v924
      %960 = vst.msk [vmem:[%s280 + $0x60] sm:$0xff] %vm947, %v929
      %961 = vst.msk [vmem:[%s280 + $0x68] sm:$0xff] %vm947, %v934
      %962 = vst.msk [vmem:[%s280 + $0x70] sm:$0xff] %vm947, %v939
      %963 = vst.msk [vmem:[%s280 + $0x78] sm:$0xff] %vm947, %v944
      %s964 = smul.u32 16, %s18
      %p965 = scmp.lt.s32.totalorder %s964, 31
      %s966 = scalar_select %p965, %s964, 31
      %s967 = smul.addr %s966, 8
      %s968 = scalar_lea.vmem %s7, %s967
      // Predicated region
      $region49: #{tpu_custom_call.1} parent=47 // pred_check
        %p969 = pneg %p188
      $region50: #{tpu_custom_call.1} parent=47 // pred_check_branch
        %971 = sbr.rel (%p969) target = $region52
      $region51: #{tpu_custom_call.1} parent=47 // pred_region
        %s972 = smul.u32 16, %s18
      $region52: #{tpu_custom_call.1} parent=47 // pred_fallthru
        _
    $region48: #{tpu_custom_call.1} parent=5 // pred_fallthru
      _
    %p973 = scmp.le.s32.totalorder 2, %s13
    // Predicated region
    $region53: #{tpu_custom_call.1} parent=5 // pred_check
      %p974 = pneg %p973
    $region54: #{tpu_custom_call.1} parent=5 // pred_check_branch
      %976 = sbr.rel (%p974) target = $region56
    $region55: #{tpu_custom_call.1} parent=5 // pred_region
      %s977 = ssub.s32 %s13, 2
      // Predicated region
      $region57: #{tpu_custom_call.1} parent=55 // pred_check
        %p978 = pneg %p194
      $region58: #{tpu_custom_call.1} parent=55 // pred_check_branch
        %980 = sbr.rel (%p978) target = $region60
      $region59: #{tpu_custom_call.1} parent=55 // pred_region
        %s981 = smul.u32 16, %s19
        %p982 = scmp.lt.s32.totalorder %s981, 31
        %s983 = scalar_select %p982, %s981, 31
        %s984 = smul.addr %s983, 8
        %s985 = scalar_lea.vmem %s7, %s984
      $region60: #{tpu_custom_call.1} parent=55 // pred_fallthru
        _
    $region56: #{tpu_custom_call.1} parent=5 // pred_fallthru
      _
  $region6: #{tpu_custom_call.1} parent=0 // loop_footer
    %s17 = sadd.s32 1, %s13
  $region7: #{tpu_custom_call.1} parent=0 // loop_footer_branch
    %12 = sbr.rel target = $region3
  $region8: #{tpu_custom_call.1} parent=0 // loop_exit
    _

</llo_original>
